<compile_context>
chip_gen: v5e
topology: v5e:2x2
jax: 0.10.0
libtpu: 0.0.40
codegen_flags: <defaults>
</compile_context>

<pallas_src>
import functools

import jax
import jax.numpy as jnp
from jax.experimental import pallas as pl
from jax.experimental.pallas import tpu as pltpu


def _attention_kernel(x_ref, gamma_ref, beta_ref, wqkv_ref, wout_ref,
                      out_ref, attn_ref, qkv_scr, ctx_scr,
                      *, heads, dim_head, eps, seq_len):
    """One grid step = one batch tile (all heads handled in-kernel).

    x_ref    : (Bt, Sp, D)        input block (f32/bf16 as given)
    wqkv_ref : (D, 3*inner)       fused QKV weight, bf16, scale folded into Q
    wout_ref : (inner, D)         output-projection weight, bf16
    out_ref  : (Bt, Sp, D)        output block
    attn_ref : (Bt, H, Sp, Sp)    attention probabilities
    qkv_scr  : (Bt*Sp, 3*inner)   bf16 fused-QKV activations
    ctx_scr  : (Bt*Sp, inner)     bf16 per-head contexts (column stripes)
    """
    bt, s, d = x_ref.shape
    inner = heads * dim_head

    # ---- LayerNorm (f32) + fused QKV projection (one big bf16 matmul) ----
    x = x_ref[...].astype(jnp.float32)                     # (Bt, Sp, D)
    mean = jnp.mean(x, axis=-1, keepdims=True)
    var = jnp.mean(jnp.square(x - mean), axis=-1, keepdims=True)
    xn = (x - mean) * jax.lax.rsqrt(var + eps)
    xn = xn * gamma_ref[0] + beta_ref[0]
    xn2 = xn.reshape(bt * s, d).astype(jnp.bfloat16)        # view (s % 8 == 0)
    qkv_scr[...] = jnp.dot(xn2, wqkv_ref[...],
                           preferred_element_type=jnp.float32
                           ).astype(qkv_scr.dtype)          # (Bt*Sp, 3*inner)

    # Mask for padded key columns (only when the wrapper padded S).
    if s != seq_len:
        col = jax.lax.broadcasted_iota(jnp.int32, (1, 1, s), 2)
        key_mask = col < seq_len
        neg_big = jnp.float32(-1e30)

    # ---- per-head attention; static column stripes, unrolled over heads ----
    for h in range(heads):
        q = qkv_scr[:, h * dim_head:(h + 1) * dim_head]
        k = qkv_scr[:, inner + h * dim_head:inner + (h + 1) * dim_head]
        v = qkv_scr[:, 2 * inner + h * dim_head:2 * inner + (h + 1) * dim_head]
        qb = q.reshape(bt, s, dim_head)
        kb = k.reshape(bt, s, dim_head)
        vb = v.reshape(bt, s, dim_head)

        sim = jnp.einsum('bqd,bkd->bqk', qb, kb,
                         preferred_element_type=jnp.float32)   # (Bt, Sp, Sp)
        if s != seq_len:
            sim = jnp.where(key_mask, sim, neg_big)
        sim_max = jnp.max(sim, axis=-1, keepdims=True)
        e = jnp.exp(sim - sim_max)
        denom = jnp.sum(e, axis=-1, keepdims=True)
        p = e * pl.reciprocal(denom, approx=True)              # softmax

        # dropout p = 0.0 -> identity (eval semantics); dropped_attn == attn
        attn_ref[:, h, :, :] = p.astype(attn_ref.dtype)

        ctx = jnp.einsum('bqk,bkd->bqd', p.astype(jnp.bfloat16), vb,
                         preferred_element_type=jnp.float32)   # (Bt, Sp, dh)
        ctx_scr[:, h * dim_head:(h + 1) * dim_head] = (
            ctx.reshape(bt * s, dim_head).astype(ctx_scr.dtype))

    # ---- single output projection with full contraction depth K = inner ----
    out = jnp.dot(ctx_scr[...], wout_ref[...],
                  preferred_element_type=jnp.float32)           # (Bt*Sp, D)
    out_ref[...] = out.reshape(bt, s, d).astype(out_ref.dtype)


def _pick_batch_tile(batch, s_pad, target_rows=256):
    """Largest divisor of `batch` with Bt*Sp near target_rows, capped at B//2
    so the 'parallel' grid axis has >= 2 steps (keeps both v7x TCs busy)."""
    bt = max(1, min(batch, target_rows // max(s_pad, 1)))
    if batch >= 2:
        bt = max(1, min(bt, batch // 2))
    while batch % bt:
        bt -= 1
    return bt


def _vmem_bytes(bt, s_pad, d, heads, dim_head, x_itemsize):
    """Rough per-core VMEM footprint for one tile configuration."""
    inner = heads * dim_head
    rows = bt * s_pad
    blocks = 2 * rows * d * x_itemsize                       # x (double buf)
    blocks += 2 * rows * d * x_itemsize                      # out
    blocks += 2 * bt * heads * s_pad * s_pad * x_itemsize    # attn
    weights = 2 * (d * 3 * inner + inner * d) * 2            # bf16, double buf
    scratch = rows * 3 * inner * 2 + rows * inner * 2        # qkv + ctx (bf16)
    live = rows * 3 * inner * 4 + 2 * bt * s_pad * s_pad * 4 + rows * inner * 4
    return blocks + weights + scratch + live


def attention_forward(x, gamma, beta, w_qkv, w_out, *, heads, dim_head,
                      eps=1e-5):
    """Pallas forward of the Attention module. Returns (out, attn).

    x: (B, S, D); w_qkv: (D, 3*inner) (x @ W layout); w_out: (inner, D).
    Matmuls run in bf16 on the MXU with f32 accumulation, so results differ
    from a pure-f32 reference by ~1e-2 relative.
    """
    B, S, D = x.shape
    inner = heads * dim_head
    scale = dim_head ** (-0.5)

    # Sequence padding: sublane multiple always; lane multiple (128) only when
    # the extra attn writeback bytes stay modest (lane-dense stores).
    if S % 128 == 0:
        s_pad = S
    elif S >= 64:
        s_pad = pl.cdiv(S, 128) * 128
    else:
        s_pad = pl.cdiv(S, 8) * 8
    x_p = x if s_pad == S else jnp.pad(x, ((0, 0), (0, s_pad - S), (0, 0)))

    # Batch tile: target ~256 rows, shrink to a ~40 MiB VMEM budget (v7x-safe).
    budget = 40 * 1024 * 1024
    itemsize = jnp.dtype(x.dtype).itemsize
    bt = _pick_batch_tile(B, s_pad)
    while bt > 1 and _vmem_bytes(bt, s_pad, D, heads, dim_head, itemsize) > budget:
        bt -= 1
        while B % bt:
            bt -= 1
    est = _vmem_bytes(bt, s_pad, D, heads, dim_head, itemsize)
    vmem_limit = int(min(max(48 * 1024 * 1024, est + 8 * 1024 * 1024),
                         96 * 1024 * 1024))

    # Fused QKV weight (scale folded into the Q columns) and output weight.
    wqkv_b = jnp.concatenate([w_qkv[:, :inner] * scale, w_qkv[:, inner:]],
                             axis=1).astype(jnp.bfloat16)        # (D, 3*inner)
    wout_b = w_out.astype(jnp.bfloat16)                          # (inner, D)
    gamma2 = gamma.reshape(1, D).astype(jnp.float32)
    beta2 = beta.reshape(1, D).astype(jnp.float32)

    kernel = functools.partial(_attention_kernel, heads=heads,
                               dim_head=dim_head, eps=eps, seq_len=S)

    out_p, attn_p = pl.pallas_call(
        kernel,
        out_shape=(
            jax.ShapeDtypeStruct((B, s_pad, D), x.dtype),
            jax.ShapeDtypeStruct((B, heads, s_pad, s_pad), x.dtype),
        ),
        grid_spec=pltpu.PrefetchScalarGridSpec(
            num_scalar_prefetch=0,
            grid=(B // bt,),
            in_specs=[
                pl.BlockSpec((bt, s_pad, D), lambda b: (b, 0, 0)),    # x
                pl.BlockSpec((1, D), lambda b: (0, 0)),               # gamma
                pl.BlockSpec((1, D), lambda b: (0, 0)),               # beta
                pl.BlockSpec((D, 3 * inner), lambda b: (0, 0)),       # wqkv
                pl.BlockSpec((inner, D), lambda b: (0, 0)),           # wout
            ],
            out_specs=[
                pl.BlockSpec((bt, s_pad, D), lambda b: (b, 0, 0)),            # out
                pl.BlockSpec((bt, heads, s_pad, s_pad), lambda b: (b, 0, 0, 0)),  # attn
            ],
            scratch_shapes=[
                pltpu.VMEM((bt * s_pad, 3 * inner), jnp.bfloat16),    # qkv
                pltpu.VMEM((bt * s_pad, inner), jnp.bfloat16),        # ctx
            ],
        ),
        compiler_params=pltpu.CompilerParams(
            dimension_semantics=("parallel",),
            vmem_limit_bytes=vmem_limit,
        ),
    )(x_p, gamma2, beta2, wqkv_b, wout_b)

    if s_pad != S:
        out_p = out_p[:, :S, :]
        attn_p = attn_p[:, :, :S, :S]
    return out_p, attn_p


def attention_reference(x, gamma, beta, w_qkv, w_out, *, heads, dim_head,
                        eps=1e-5):
    """Pure-JAX f32 reference matching the PyTorch module semantics."""
    B, S, D = x.shape
    inner = heads * dim_head
    scale = dim_head ** (-0.5)

    mean = jnp.mean(x, axis=-1, keepdims=True)
    var = jnp.mean((x - mean) ** 2, axis=-1, keepdims=True)
    xn = (x - mean) / jnp.sqrt(var + eps) * gamma + beta

    qkv = xn @ w_qkv
    q, k, v = jnp.split(qkv, 3, axis=-1)
    q = q.reshape(B, S, heads, dim_head).transpose(0, 2, 1, 3) * scale
    k = k.reshape(B, S, heads, dim_head).transpose(0, 2, 1, 3)
    v = v.reshape(B, S, heads, dim_head).transpose(0, 2, 1, 3)
    sim = jnp.einsum('bhqd,bhkd->bhqk', q, k)
    attn = jax.nn.softmax(sim, axis=-1)
    out = jnp.einsum('bhqk,bhkd->bhqd', attn, v)
    out = out.transpose(0, 2, 1, 3).reshape(B, S, inner)
    out = out @ w_out
    return out, attn


if __name__ == "__main__":
    # Small, deterministic config consistent with the module.
    B, S, D = 2, 8, 32
    heads, dim_head = 4, 16
    inner = heads * dim_head

    key = jax.random.PRNGKey(0)
    kx, kqkv, kout = jax.random.split(key, 3)

    x = jax.random.normal(kx, (B, S, D), dtype=jnp.float32)
    w_qkv = jax.random.normal(kqkv, (D, 3 * inner), jnp.float32) * (D ** -0.5)
    w_out = jax.random.normal(kout, (inner, D), jnp.float32) * (inner ** -0.5)
    gamma = jnp.ones((D,), jnp.float32)   # LayerNorm weight init
    beta = jnp.zeros((D,), jnp.float32)   # LayerNorm bias init

    out, attn = attention_forward(x, gamma, beta, w_qkv, w_out,
                                  heads=heads, dim_head=dim_head)
    out = jax.block_until_ready(out)
    attn = jax.block_until_ready(attn)

    ref_out, ref_attn = attention_reference(x, gamma, beta, w_qkv, w_out,
                                            heads=heads, dim_head=dim_head)
    assert out.shape == (B, S, D) and attn.shape == (B, heads, S, S)
    # bf16 MXU feeding (f32 accumulation) vs. a pure-f32 reference -> ~1e-2
    # relative differences; compare with a correspondingly loose tolerance.
    assert jnp.allclose(out, ref_out, rtol=5e-2, atol=5e-2)
    assert jnp.allclose(attn, ref_attn, rtol=5e-2, atol=5e-2)

    print("KERNEL_OK")
</pallas_src>

<mosaic_0001>
module attributes {stable_mosaic.version = 11 : i64} {
  func.func @_attention_kernel(%arg0: i32, %arg1: memref<1x8x32xf32, #tpu.memory_space<vmem>>, %arg2: memref<1x32xf32, #tpu.memory_space<vmem>>, %arg3: memref<1x32xf32, #tpu.memory_space<vmem>>, %arg4: memref<32x192xbf16, #tpu.memory_space<vmem>>, %arg5: memref<64x32xbf16, #tpu.memory_space<vmem>>, %arg6: memref<1x8x32xf32, #tpu.memory_space<vmem>>, %arg7: memref<1x4x8x8xf32, #tpu.memory_space<vmem>>, %arg8: memref<8x192xbf16, #tpu.memory_space<vmem>>, %arg9: memref<8x64xbf16, #tpu.memory_space<vmem>>) attributes {dimension_semantics = [#tpu.dimension_semantics<parallel>], iteration_bounds = array<i64: 2>, scalar_prefetch = 0 : i64, scratch_operands = 2 : i64, tpu.core_type = #tpu.core_type<tc>, window_params = [{transform_indices = @transform_0, window_bounds = array<i64: 1, 8, 32>}, {pipeline_mode = #tpu.pipeline_mode<synchronous>, transform_indices = @transform_1, window_bounds = array<i64: 1, 32>}, {pipeline_mode = #tpu.pipeline_mode<synchronous>, transform_indices = @transform_2, window_bounds = array<i64: 1, 32>}, {pipeline_mode = #tpu.pipeline_mode<synchronous>, transform_indices = @transform_3, window_bounds = array<i64: 32, 192>}, {pipeline_mode = #tpu.pipeline_mode<synchronous>, transform_indices = @transform_4, window_bounds = array<i64: 64, 32>}, {transform_indices = @transform_5, window_bounds = array<i64: 1, 8, 32>}, {transform_indices = @transform_6, window_bounds = array<i64: 1, 4, 8, 8>}]} {
    %c0 = arith.constant 0 : index
    %c0_0 = arith.constant 0 : index
    %c0_1 = arith.constant 0 : index
    %0 = vector.load %arg1[%c0, %c0_0, %c0_1] : memref<1x8x32xf32, #tpu.memory_space<vmem>>, vector<1x8x32xf32>
    %cst = arith.constant dense<0.000000e+00> : vector<1x8xf32>
    %1 = vector.multi_reduction <add>, %0, %cst [2] : vector<1x8x32xf32> to vector<1x8xf32>
    %2 = vector.shape_cast %1 : vector<1x8xf32> to vector<1x8x1xf32>
    %cst_2 = arith.constant 3.200000e+01 : f32
    %3 = vector.broadcast %cst_2 : f32 to vector<1x8x1xf32>
    %4 = arith.divf %2, %3 : vector<1x8x1xf32>
    %5 = vector.broadcast %4 : vector<1x8x1xf32> to vector<1x8x32xf32>
    %6 = arith.subf %0, %5 : vector<1x8x32xf32>
    %7 = arith.mulf %6, %6 : vector<1x8x32xf32>
    %cst_3 = arith.constant dense<0.000000e+00> : vector<1x8xf32>
    %8 = vector.multi_reduction <add>, %7, %cst_3 [2] : vector<1x8x32xf32> to vector<1x8xf32>
    %9 = vector.shape_cast %8 : vector<1x8xf32> to vector<1x8x1xf32>
    %cst_4 = arith.constant 3.200000e+01 : f32
    %10 = vector.broadcast %cst_4 : f32 to vector<1x8x1xf32>
    %11 = arith.divf %9, %10 : vector<1x8x1xf32>
    %12 = vector.broadcast %4 : vector<1x8x1xf32> to vector<1x8x32xf32>
    %13 = arith.subf %0, %12 : vector<1x8x32xf32>
    %cst_5 = arith.constant 9.99999974E-6 : f32
    %14 = vector.broadcast %cst_5 : f32 to vector<1x8x1xf32>
    %15 = arith.addf %11, %14 : vector<1x8x1xf32>
    %16 = math.rsqrt %15 : vector<1x8x1xf32>
    %17 = vector.broadcast %16 : vector<1x8x1xf32> to vector<1x8x32xf32>
    %18 = arith.mulf %13, %17 : vector<1x8x32xf32>
    %c0_6 = arith.constant 0 : index
    %c0_7 = arith.constant 0 : index
    %19 = vector.load %arg2[%c0_6, %c0_7] : memref<1x32xf32, #tpu.memory_space<vmem>>, vector<1x32xf32>
    %20 = vector.shape_cast %19 : vector<1x32xf32> to vector<32xf32>
    %21 = vector.shape_cast %20 : vector<32xf32> to vector<1x1x32xf32>
    %22 = vector.broadcast %21 : vector<1x1x32xf32> to vector<1x8x32xf32>
    %23 = arith.mulf %18, %22 : vector<1x8x32xf32>
    %c0_8 = arith.constant 0 : index
    %c0_9 = arith.constant 0 : index
    %24 = vector.load %arg3[%c0_8, %c0_9] : memref<1x32xf32, #tpu.memory_space<vmem>>, vector<1x32xf32>
    %25 = vector.shape_cast %24 : vector<1x32xf32> to vector<32xf32>
    %26 = vector.shape_cast %25 : vector<32xf32> to vector<1x1x32xf32>
    %27 = vector.broadcast %26 : vector<1x1x32xf32> to vector<1x8x32xf32>
    %28 = arith.addf %23, %27 : vector<1x8x32xf32>
    %29 = vector.shape_cast %28 : vector<1x8x32xf32> to vector<8x32xf32>
    %30 = arith.truncf %29 : vector<8x32xf32> to vector<8x32xbf16>
    %c0_10 = arith.constant 0 : index
    %c0_11 = arith.constant 0 : index
    %31 = vector.load %arg4[%c0_10, %c0_11] : memref<32x192xbf16, #tpu.memory_space<vmem>>, vector<32x192xbf16>
    %cst_12 = arith.constant dense<0.000000e+00> : vector<8x192xf32>
    %32 = tpu.matmul %30, %31, %cst_12 {dimension_numbers = #tpu.dot_dimension_numbers<[1], [0], [0], [1], [0, 0, 1, 1], [], []>} : vector<8x32xbf16>, vector<32x192xbf16>, vector<8x192xf32> -> vector<8x192xf32>
    %33 = arith.truncf %32 : vector<8x192xf32> to vector<8x192xbf16>
    %c0_13 = arith.constant 0 : index
    %c0_14 = arith.constant 0 : index
    %34 = vector.load %arg8[%c0_13, %c0_14] : memref<8x192xbf16, #tpu.memory_space<vmem>>, vector<8x192xbf16>
    tpu.vector_store %arg8[%c0_13, %c0_14], %33 {strides = array<i32>} : memref<8x192xbf16, #tpu.memory_space<vmem>>, vector<8x192xbf16>,
    %c0_15 = arith.constant 0 : index
    %c0_16 = arith.constant 0 : index
    %35 = vector.load %arg8[%c0_15, %c0_16] : memref<8x192xbf16, #tpu.memory_space<vmem>>, vector<8x16xbf16>
    %c0_17 = arith.constant 0 : index
    %c64 = arith.constant 64 : index
    %36 = vector.load %arg8[%c0_17, %c64] : memref<8x192xbf16, #tpu.memory_space<vmem>>, vector<8x16xbf16>
    %c0_18 = arith.constant 0 : index
    %c128 = arith.constant 128 : index
    %37 = vector.load %arg8[%c0_18, %c128] : memref<8x192xbf16, #tpu.memory_space<vmem>>, vector<8x16xbf16>
    %38 = vector.shape_cast %35 : vector<8x16xbf16> to vector<1x8x16xbf16>
    %39 = vector.shape_cast %36 : vector<8x16xbf16> to vector<1x8x16xbf16>
    %40 = vector.shape_cast %37 : vector<8x16xbf16> to vector<1x8x16xbf16>
    "tpu.trace_start"() <{level = 10 : i32, message = "bqd,bkd->bqk"}> : () -> ()
    %cst_19 = arith.constant dense<0.000000e+00> : vector<1x8x8xf32>
    %41 = tpu.matmul %38, %39, %cst_19 {dimension_numbers = #tpu.dot_dimension_numbers<[2], [2], [1], [1], [0, 0, 0, 1, 1, 1], [0], [0]>} : vector<1x8x16xbf16>, vector<1x8x16xbf16>, vector<1x8x8xf32> -> vector<1x8x8xf32>
    "tpu.trace_stop"() : () -> ()
    %cst_20 = arith.constant dense<0xFF800000> : vector<1x8xf32>
    %42 = vector.multi_reduction <maximumf>, %41, %cst_20 [2] : vector<1x8x8xf32> to vector<1x8xf32>
    %43 = vector.shape_cast %42 : vector<1x8xf32> to vector<1x8x1xf32>
    %44 = vector.broadcast %43 : vector<1x8x1xf32> to vector<1x8x8xf32>
    %45 = arith.subf %41, %44 : vector<1x8x8xf32>
    %46 = math.exp %45 : vector<1x8x8xf32>
    %cst_21 = arith.constant dense<0.000000e+00> : vector<1x8xf32>
    %47 = vector.multi_reduction <add>, %46, %cst_21 [2] : vector<1x8x8xf32> to vector<1x8xf32>
    %48 = vector.shape_cast %47 : vector<1x8xf32> to vector<1x8x1xf32>
    %49 = tpu.reciprocal %48 {approx = true} : vector<1x8x1xf32> -> vector<1x8x1xf32>
    %50 = vector.broadcast %49 : vector<1x8x1xf32> to vector<1x8x8xf32>
    %51 = arith.mulf %46, %50 : vector<1x8x8xf32>
    %c0_22 = arith.constant 0 : index
    %c0_23 = arith.constant 0 : index
    %c0_24 = arith.constant 0 : index
    %c0_25 = arith.constant 0 : index
    %52 = vector.load %arg7[%c0_22, %c0_23, %c0_24, %c0_25] : memref<1x4x8x8xf32, #tpu.memory_space<vmem>>, vector<1x1x8x8xf32>
    %53 = vector.shape_cast %52 : vector<1x1x8x8xf32> to vector<1x8x8xf32>
    %54 = vector.shape_cast %51 : vector<1x8x8xf32> to vector<1x1x8x8xf32>
    tpu.vector_store %arg7[%c0_22, %c0_23, %c0_24, %c0_25], %54 {strides = array<i32>} : memref<1x4x8x8xf32, #tpu.memory_space<vmem>>, vector<1x1x8x8xf32>,
    %55 = arith.truncf %51 : vector<1x8x8xf32> to vector<1x8x8xbf16>
    "tpu.trace_start"() <{level = 10 : i32, message = "bqk,bkd->bqd"}> : () -> ()
    %cst_26 = arith.constant dense<0.000000e+00> : vector<1x8x16xf32>
    %56 = tpu.matmul %55, %40, %cst_26 {dimension_numbers = #tpu.dot_dimension_numbers<[2], [1], [1], [2], [0, 0, 0, 1, 1, 2], [0], [0]>} : vector<1x8x8xbf16>, vector<1x8x16xbf16>, vector<1x8x16xf32> -> vector<1x8x16xf32>
    "tpu.trace_stop"() : () -> ()
    %57 = vector.shape_cast %56 : vector<1x8x16xf32> to vector<8x16xf32>
    %58 = arith.truncf %57 : vector<8x16xf32> to vector<8x16xbf16>
    %c0_27 = arith.constant 0 : index
    %c0_28 = arith.constant 0 : index
    %59 = vector.load %arg9[%c0_27, %c0_28] : memref<8x64xbf16, #tpu.memory_space<vmem>>, vector<8x16xbf16>
    tpu.vector_store %arg9[%c0_27, %c0_28], %58 {strides = array<i32>} : memref<8x64xbf16, #tpu.memory_space<vmem>>, vector<8x16xbf16>,
    %c0_29 = arith.constant 0 : index
    %c16 = arith.constant 16 : index
    %60 = vector.load %arg8[%c0_29, %c16] : memref<8x192xbf16, #tpu.memory_space<vmem>>, vector<8x16xbf16>
    %c0_30 = arith.constant 0 : index
    %c80 = arith.constant 80 : index
    %61 = vector.load %arg8[%c0_30, %c80] : memref<8x192xbf16, #tpu.memory_space<vmem>>, vector<8x16xbf16>
    %c0_31 = arith.constant 0 : index
    %c144 = arith.constant 144 : index
    %62 = vector.load %arg8[%c0_31, %c144] : memref<8x192xbf16, #tpu.memory_space<vmem>>, vector<8x16xbf16>
    %63 = vector.shape_cast %60 : vector<8x16xbf16> to vector<1x8x16xbf16>
    %64 = vector.shape_cast %61 : vector<8x16xbf16> to vector<1x8x16xbf16>
    %65 = vector.shape_cast %62 : vector<8x16xbf16> to vector<1x8x16xbf16>
    "tpu.trace_start"() <{level = 10 : i32, message = "bqd,bkd->bqk"}> : () -> ()
    %cst_32 = arith.constant dense<0.000000e+00> : vector<1x8x8xf32>
    %66 = tpu.matmul %63, %64, %cst_32 {dimension_numbers = #tpu.dot_dimension_numbers<[2], [2], [1], [1], [0, 0, 0, 1, 1, 1], [0], [0]>} : vector<1x8x16xbf16>, vector<1x8x16xbf16>, vector<1x8x8xf32> -> vector<1x8x8xf32>
    "tpu.trace_stop"() : () -> ()
    %cst_33 = arith.constant dense<0xFF800000> : vector<1x8xf32>
    %67 = vector.multi_reduction <maximumf>, %66, %cst_33 [2] : vector<1x8x8xf32> to vector<1x8xf32>
    %68 = vector.shape_cast %67 : vector<1x8xf32> to vector<1x8x1xf32>
    %69 = vector.broadcast %68 : vector<1x8x1xf32> to vector<1x8x8xf32>
    %70 = arith.subf %66, %69 : vector<1x8x8xf32>
    %71 = math.exp %70 : vector<1x8x8xf32>
    %cst_34 = arith.constant dense<0.000000e+00> : vector<1x8xf32>
    %72 = vector.multi_reduction <add>, %71, %cst_34 [2] : vector<1x8x8xf32> to vector<1x8xf32>
    %73 = vector.shape_cast %72 : vector<1x8xf32> to vector<1x8x1xf32>
    %74 = tpu.reciprocal %73 {approx = true} : vector<1x8x1xf32> -> vector<1x8x1xf32>
    %75 = vector.broadcast %74 : vector<1x8x1xf32> to vector<1x8x8xf32>
    %76 = arith.mulf %71, %75 : vector<1x8x8xf32>
    %c0_35 = arith.constant 0 : index
    %c1 = arith.constant 1 : index
    %c0_36 = arith.constant 0 : index
    %c0_37 = arith.constant 0 : index
    %77 = vector.load %arg7[%c0_35, %c1, %c0_36, %c0_37] : memref<1x4x8x8xf32, #tpu.memory_space<vmem>>, vector<1x1x8x8xf32>
    %78 = vector.shape_cast %77 : vector<1x1x8x8xf32> to vector<1x8x8xf32>
    %79 = vector.shape_cast %76 : vector<1x8x8xf32> to vector<1x1x8x8xf32>
    tpu.vector_store %arg7[%c0_35, %c1, %c0_36, %c0_37], %79 {strides = array<i32>} : memref<1x4x8x8xf32, #tpu.memory_space<vmem>>, vector<1x1x8x8xf32>,
    %80 = arith.truncf %76 : vector<1x8x8xf32> to vector<1x8x8xbf16>
    "tpu.trace_start"() <{level = 10 : i32, message = "bqk,bkd->bqd"}> : () -> ()
    %cst_38 = arith.constant dense<0.000000e+00> : vector<1x8x16xf32>
    %81 = tpu.matmul %80, %65, %cst_38 {dimension_numbers = #tpu.dot_dimension_numbers<[2], [1], [1], [2], [0, 0, 0, 1, 1, 2], [0], [0]>} : vector<1x8x8xbf16>, vector<1x8x16xbf16>, vector<1x8x16xf32> -> vector<1x8x16xf32>
    "tpu.trace_stop"() : () -> ()
    %82 = vector.shape_cast %81 : vector<1x8x16xf32> to vector<8x16xf32>
    %83 = arith.truncf %82 : vector<8x16xf32> to vector<8x16xbf16>
    %c0_39 = arith.constant 0 : index
    %c16_40 = arith.constant 16 : index
    %84 = vector.load %arg9[%c0_39, %c16_40] : memref<8x64xbf16, #tpu.memory_space<vmem>>, vector<8x16xbf16>
    tpu.vector_store %arg9[%c0_39, %c16_40], %83 {strides = array<i32>} : memref<8x64xbf16, #tpu.memory_space<vmem>>, vector<8x16xbf16>,
    %c0_41 = arith.constant 0 : index
    %c32 = arith.constant 32 : index
    %85 = vector.load %arg8[%c0_41, %c32] : memref<8x192xbf16, #tpu.memory_space<vmem>>, vector<8x16xbf16>
    %c0_42 = arith.constant 0 : index
    %c96 = arith.constant 96 : index
    %86 = vector.load %arg8[%c0_42, %c96] : memref<8x192xbf16, #tpu.memory_space<vmem>>, vector<8x16xbf16>
    %c0_43 = arith.constant 0 : index
    %c160 = arith.constant 160 : index
    %87 = vector.load %arg8[%c0_43, %c160] : memref<8x192xbf16, #tpu.memory_space<vmem>>, vector<8x16xbf16>
    %88 = vector.shape_cast %85 : vector<8x16xbf16> to vector<1x8x16xbf16>
    %89 = vector.shape_cast %86 : vector<8x16xbf16> to vector<1x8x16xbf16>
    %90 = vector.shape_cast %87 : vector<8x16xbf16> to vector<1x8x16xbf16>
    "tpu.trace_start"() <{level = 10 : i32, message = "bqd,bkd->bqk"}> : () -> ()
    %cst_44 = arith.constant dense<0.000000e+00> : vector<1x8x8xf32>
    %91 = tpu.matmul %88, %89, %cst_44 {dimension_numbers = #tpu.dot_dimension_numbers<[2], [2], [1], [1], [0, 0, 0, 1, 1, 1], [0], [0]>} : vector<1x8x16xbf16>, vector<1x8x16xbf16>, vector<1x8x8xf32> -> vector<1x8x8xf32>
    "tpu.trace_stop"() : () -> ()
    %cst_45 = arith.constant dense<0xFF800000> : vector<1x8xf32>
    %92 = vector.multi_reduction <maximumf>, %91, %cst_45 [2] : vector<1x8x8xf32> to vector<1x8xf32>
    %93 = vector.shape_cast %92 : vector<1x8xf32> to vector<1x8x1xf32>
    %94 = vector.broadcast %93 : vector<1x8x1xf32> to vector<1x8x8xf32>
    %95 = arith.subf %91, %94 : vector<1x8x8xf32>
    %96 = math.exp %95 : vector<1x8x8xf32>
    %cst_46 = arith.constant dense<0.000000e+00> : vector<1x8xf32>
    %97 = vector.multi_reduction <add>, %96, %cst_46 [2] : vector<1x8x8xf32> to vector<1x8xf32>
    %98 = vector.shape_cast %97 : vector<1x8xf32> to vector<1x8x1xf32>
    %99 = tpu.reciprocal %98 {approx = true} : vector<1x8x1xf32> -> vector<1x8x1xf32>
    %100 = vector.broadcast %99 : vector<1x8x1xf32> to vector<1x8x8xf32>
    %101 = arith.mulf %96, %100 : vector<1x8x8xf32>
    %c0_47 = arith.constant 0 : index
    %c2 = arith.constant 2 : index
    %c0_48 = arith.constant 0 : index
    %c0_49 = arith.constant 0 : index
    %102 = vector.load %arg7[%c0_47, %c2, %c0_48, %c0_49] : memref<1x4x8x8xf32, #tpu.memory_space<vmem>>, vector<1x1x8x8xf32>
    %103 = vector.shape_cast %102 : vector<1x1x8x8xf32> to vector<1x8x8xf32>
    %104 = vector.shape_cast %101 : vector<1x8x8xf32> to vector<1x1x8x8xf32>
    tpu.vector_store %arg7[%c0_47, %c2, %c0_48, %c0_49], %104 {strides = array<i32>} : memref<1x4x8x8xf32, #tpu.memory_space<vmem>>, vector<1x1x8x8xf32>,
    %105 = arith.truncf %101 : vector<1x8x8xf32> to vector<1x8x8xbf16>
    "tpu.trace_start"() <{level = 10 : i32, message = "bqk,bkd->bqd"}> : () -> ()
    %cst_50 = arith.constant dense<0.000000e+00> : vector<1x8x16xf32>
    %106 = tpu.matmul %105, %90, %cst_50 {dimension_numbers = #tpu.dot_dimension_numbers<[2], [1], [1], [2], [0, 0, 0, 1, 1, 2], [0], [0]>} : vector<1x8x8xbf16>, vector<1x8x16xbf16>, vector<1x8x16xf32> -> vector<1x8x16xf32>
    "tpu.trace_stop"() : () -> ()
    %107 = vector.shape_cast %106 : vector<1x8x16xf32> to vector<8x16xf32>
    %108 = arith.truncf %107 : vector<8x16xf32> to vector<8x16xbf16>
    %c0_51 = arith.constant 0 : index
    %c32_52 = arith.constant 32 : index
    %109 = vector.load %arg9[%c0_51, %c32_52] : memref<8x64xbf16, #tpu.memory_space<vmem>>, vector<8x16xbf16>
    tpu.vector_store %arg9[%c0_51, %c32_52], %108 {strides = array<i32>} : memref<8x64xbf16, #tpu.memory_space<vmem>>, vector<8x16xbf16>,
    %c0_53 = arith.constant 0 : index
    %c48 = arith.constant 48 : index
    %110 = vector.load %arg8[%c0_53, %c48] : memref<8x192xbf16, #tpu.memory_space<vmem>>, vector<8x16xbf16>
    %c0_54 = arith.constant 0 : index
    %c112 = arith.constant 112 : index
    %111 = vector.load %arg8[%c0_54, %c112] : memref<8x192xbf16, #tpu.memory_space<vmem>>, vector<8x16xbf16>
    %c0_55 = arith.constant 0 : index
    %c176 = arith.constant 176 : index
    %112 = vector.load %arg8[%c0_55, %c176] : memref<8x192xbf16, #tpu.memory_space<vmem>>, vector<8x16xbf16>
    %113 = vector.shape_cast %110 : vector<8x16xbf16> to vector<1x8x16xbf16>
    %114 = vector.shape_cast %111 : vector<8x16xbf16> to vector<1x8x16xbf16>
    %115 = vector.shape_cast %112 : vector<8x16xbf16> to vector<1x8x16xbf16>
    "tpu.trace_start"() <{level = 10 : i32, message = "bqd,bkd->bqk"}> : () -> ()
    %cst_56 = arith.constant dense<0.000000e+00> : vector<1x8x8xf32>
    %116 = tpu.matmul %113, %114, %cst_56 {dimension_numbers = #tpu.dot_dimension_numbers<[2], [2], [1], [1], [0, 0, 0, 1, 1, 1], [0], [0]>} : vector<1x8x16xbf16>, vector<1x8x16xbf16>, vector<1x8x8xf32> -> vector<1x8x8xf32>
    "tpu.trace_stop"() : () -> ()
    %cst_57 = arith.constant dense<0xFF800000> : vector<1x8xf32>
    %117 = vector.multi_reduction <maximumf>, %116, %cst_57 [2] : vector<1x8x8xf32> to vector<1x8xf32>
    %118 = vector.shape_cast %117 : vector<1x8xf32> to vector<1x8x1xf32>
    %119 = vector.broadcast %118 : vector<1x8x1xf32> to vector<1x8x8xf32>
    %120 = arith.subf %116, %119 : vector<1x8x8xf32>
    %121 = math.exp %120 : vector<1x8x8xf32>
    %cst_58 = arith.constant dense<0.000000e+00> : vector<1x8xf32>
    %122 = vector.multi_reduction <add>, %121, %cst_58 [2] : vector<1x8x8xf32> to vector<1x8xf32>
    %123 = vector.shape_cast %122 : vector<1x8xf32> to vector<1x8x1xf32>
    %124 = tpu.reciprocal %123 {approx = true} : vector<1x8x1xf32> -> vector<1x8x1xf32>
    %125 = vector.broadcast %124 : vector<1x8x1xf32> to vector<1x8x8xf32>
    %126 = arith.mulf %121, %125 : vector<1x8x8xf32>
    %c0_59 = arith.constant 0 : index
    %c3 = arith.constant 3 : index
    %c0_60 = arith.constant 0 : index
    %c0_61 = arith.constant 0 : index
    %127 = vector.load %arg7[%c0_59, %c3, %c0_60, %c0_61] : memref<1x4x8x8xf32, #tpu.memory_space<vmem>>, vector<1x1x8x8xf32>
    %128 = vector.shape_cast %127 : vector<1x1x8x8xf32> to vector<1x8x8xf32>
    %129 = vector.shape_cast %126 : vector<1x8x8xf32> to vector<1x1x8x8xf32>
    tpu.vector_store %arg7[%c0_59, %c3, %c0_60, %c0_61], %129 {strides = array<i32>} : memref<1x4x8x8xf32, #tpu.memory_space<vmem>>, vector<1x1x8x8xf32>,
    %130 = arith.truncf %126 : vector<1x8x8xf32> to vector<1x8x8xbf16>
    "tpu.trace_start"() <{level = 10 : i32, message = "bqk,bkd->bqd"}> : () -> ()
    %cst_62 = arith.constant dense<0.000000e+00> : vector<1x8x16xf32>
    %131 = tpu.matmul %130, %115, %cst_62 {dimension_numbers = #tpu.dot_dimension_numbers<[2], [1], [1], [2], [0, 0, 0, 1, 1, 2], [0], [0]>} : vector<1x8x8xbf16>, vector<1x8x16xbf16>, vector<1x8x16xf32> -> vector<1x8x16xf32>
    "tpu.trace_stop"() : () -> ()
    %132 = vector.shape_cast %131 : vector<1x8x16xf32> to vector<8x16xf32>
    %133 = arith.truncf %132 : vector<8x16xf32> to vector<8x16xbf16>
    %c0_63 = arith.constant 0 : index
    %c48_64 = arith.constant 48 : index
    %134 = vector.load %arg9[%c0_63, %c48_64] : memref<8x64xbf16, #tpu.memory_space<vmem>>, vector<8x16xbf16>
    tpu.vector_store %arg9[%c0_63, %c48_64], %133 {strides = array<i32>} : memref<8x64xbf16, #tpu.memory_space<vmem>>, vector<8x16xbf16>,
    %c0_65 = arith.constant 0 : index
    %c0_66 = arith.constant 0 : index
    %135 = vector.load %arg9[%c0_65, %c0_66] : memref<8x64xbf16, #tpu.memory_space<vmem>>, vector<8x64xbf16>
    %c0_67 = arith.constant 0 : index
    %c0_68 = arith.constant 0 : index
    %136 = vector.load %arg5[%c0_67, %c0_68] : memref<64x32xbf16, #tpu.memory_space<vmem>>, vector<64x32xbf16>
    %cst_69 = arith.constant dense<0.000000e+00> : vector<8x32xf32>
    %137 = tpu.matmul %135, %136, %cst_69 {dimension_numbers = #tpu.dot_dimension_numbers<[1], [0], [0], [1], [0, 0, 1, 1], [], []>} : vector<8x64xbf16>, vector<64x32xbf16>, vector<8x32xf32> -> vector<8x32xf32>
    %138 = vector.shape_cast %137 : vector<8x32xf32> to vector<1x8x32xf32>
    %c0_70 = arith.constant 0 : index
    %c0_71 = arith.constant 0 : index
    %c0_72 = arith.constant 0 : index
    %139 = vector.load %arg6[%c0_70, %c0_71, %c0_72] : memref<1x8x32xf32, #tpu.memory_space<vmem>>, vector<1x8x32xf32>
    tpu.vector_store %arg6[%c0_70, %c0_71, %c0_72], %138 {strides = array<i32>} : memref<1x8x32xf32, #tpu.memory_space<vmem>>, vector<1x8x32xf32>,
    return
  }
  func.func @transform_0(%arg0: i32) -> (i32, i32, i32) {
    %c0_i32 = arith.constant 0 : i32
    %c0_i32_0 = arith.constant 0 : i32
    %c0_i32_1 = arith.constant 0 : i32
    return %arg0, %c0_i32, %c0_i32_0 : i32, i32, i32
  }
  func.func @transform_1(%arg0: i32) -> (i32, i32) {
    %c0_i32 = arith.constant 0 : i32
    %c0_i32_0 = arith.constant 0 : i32
    %c0_i32_1 = arith.constant 0 : i32
    return %c0_i32, %c0_i32_0 : i32, i32
  }
  func.func @transform_2(%arg0: i32) -> (i32, i32) {
    %c0_i32 = arith.constant 0 : i32
    %c0_i32_0 = arith.constant 0 : i32
    %c0_i32_1 = arith.constant 0 : i32
    return %c0_i32, %c0_i32_0 : i32, i32
  }
  func.func @transform_3(%arg0: i32) -> (i32, i32) {
    %c0_i32 = arith.constant 0 : i32
    %c0_i32_0 = arith.constant 0 : i32
    %c0_i32_1 = arith.constant 0 : i32
    return %c0_i32, %c0_i32_0 : i32, i32
  }
  func.func @transform_4(%arg0: i32) -> (i32, i32) {
    %c0_i32 = arith.constant 0 : i32
    %c0_i32_0 = arith.constant 0 : i32
    %c0_i32_1 = arith.constant 0 : i32
    return %c0_i32, %c0_i32_0 : i32, i32
  }
  func.func @transform_5(%arg0: i32) -> (i32, i32, i32) {
    %c0_i32 = arith.constant 0 : i32
    %c0_i32_0 = arith.constant 0 : i32
    %c0_i32_1 = arith.constant 0 : i32
    return %arg0, %c0_i32, %c0_i32_0 : i32, i32, i32
  }
  func.func @transform_6(%arg0: i32) -> (i32, i32, i32, i32) {
    %c0_i32 = arith.constant 0 : i32
    %c0_i32_0 = arith.constant 0 : i32
    %c0_i32_1 = arith.constant 0 : i32
    %c0_i32_2 = arith.constant 0 : i32
    return %arg0, %c0_i32, %c0_i32_0, %c0_i32_1 : i32, i32, i32, i32
  }
}

</mosaic_0001>

<llo_original>
// kernel: tpu_custom_call.1
$region0: #{tpu_custom_call.1}
  #allocation0 [shape = 'u32[]', space=smem, size = 0x4, offset = 0x4, fixed_abs, tag = 'smem constant byte address 0x4 - core index']
  #allocation1 [shape = 'u32[72,128]{1,0:T(1,128)}', space=vmem, size = 0x9000, scoped, tag = 'internal scratch']
  #allocation2 [shape = 'bf16[8,192]{1,0:T(8,128)(2,1)}', space=vmem, size = 0x1000, scoped, tag = 'scratch operand']
  #allocation3 [shape = 'bf16[8,64]{1,0:T(8,128)(2,1)}', space=vmem, size = 0x800, scoped, tag = 'scratch operand']
  %s0 = inlined_call_operand.vmem [shape: f32[2,8,32], index: 0, kind: input, shape index: {}]
  %s1 = inlined_call_operand.vmem [shape: f32[1,32], index: 1, kind: input, shape index: {}]
  %s2 = inlined_call_operand.vmem [shape: f32[1,32], index: 2, kind: input, shape index: {}]
  %s3 = inlined_call_operand.vmem [shape: bf16[32,192], index: 3, kind: input, shape index: {}]
  %s4 = inlined_call_operand.vmem [shape: bf16[64,32], index: 4, kind: input, shape index: {}]
  %s5 = inlined_call_operand.hbm [shape: f32[2,8,32], index: 5, kind: output, shape index: {0}]
  %s6 = inlined_call_operand.hbm [shape: f32[2,4,8,8], index: 6, kind: output, shape index: {1}]
  %7 = xla_tuple %s5, %s6
  %s8 = sld [smem:[#allocation0]]
  $region61: #{tpu_custom_call.1} parent=0
    _
  %s10 = ssub.s32 1, %s8
  %s11 = scalar_select 0, %s10, %s8
  $region1: #{tpu_custom_call.1} parent=0
    #allocation4 [shape = 'u8[8192]{0}', space=vmem, size = 0x2000, scoped, tag = 'output window, operand 0']
    #allocation5 [shape = 's32[2]{0}', space=sflag, size = 0x8, scoped, tag = 'scoped memory for tpu_custom_call.1']
    #allocation6 [shape = 'u8[32768]{0}', space=vmem, size = 0x8000, scoped, tag = 'output window, operand 1']
    #allocation7 [shape = 's32[2]{0}', space=sflag, size = 0x8, scoped, tag = 'scoped memory for tpu_custom_call.1']
    %12 = vsyncpa [#allocation5], 0
    %s13 = scalar_lea.sflag [#allocation5], 1
    %14 = vsyncpa %s13, 0
    %15 = vsyncpa [#allocation7], 0
    %s16 = scalar_lea.sflag [#allocation7], 1
    %17 = vsyncpa %s16, 0
    loop: start=0, step=1, limit=4
    $region2: #{tpu_custom_call.1} parent=1 // loop_pre_header
      _
    $region3: #{tpu_custom_call.1} parent=1 // loop_header
      %s19 = sphi 0, %s23
      %p20 = scmp.ge.s32.totalorder %s19, 4
      %s29 = sphi 0, %s31
      %s32 = sphi 0, %s29
      %s33 = sphi 0, %s32
      %s49 = sphi 0, %s33
      %s53 = sphi 0, %s53
      %s55 = sphi 0, %s53
      %s56 = sphi 0, %s55
      %s70 = sphi 0, %s56
      %s74 = sphi 0, %s74
      %s76 = sphi 0, %s74
      %s77 = sphi 0, %s76
      %s91 = sphi 0, %s77
      %s95 = sphi 0, %s95
      %s97 = sphi 0, %s95
      %s98 = sphi 0, %s97
      %s112 = sphi 0, %s98
      %s116 = sphi 0, %s116
      %s118 = sphi 0, %s116
      %s119 = sphi 0, %s118
      %s133 = sphi 0, %s119
      %s139 = sphi 0, %s141
      %s142 = sphi 0, %s139
      %s143 = sphi 0, %s142
      %s159 = sphi 0, %s143
      %s165 = sphi 0, %s167
      %s168 = sphi 0, %s165
      %s169 = sphi 0, %s168
      %s185 = sphi 0, %s169
    $region4: #{tpu_custom_call.1} parent=1 // loop_header_branch
      %22 = sbr.rel (%p20) target = $region8
    $region5: #{tpu_custom_call.1} parent=1 // loop_body
      %s24 = ssub.s32 %s19, 1
      %s25 = ssub.s32 %s19, 2
      %s26 = sadd.s32 %s19, 1
      %s27 = ssub.s32 %s19, %s26
      %p28 = scmp.eq.s32.totalorder %s27, 0
      %s30 = sadd.s32 %s29, 1
      %s31 = scalar_select %p28, %s29, %s30
      %p34 = pneg %p28
      %p35 = scmp.eq.s32.totalorder %s19, 1
      %p36 = por %p34, %p35
      %p37 = scmp.ne.s32.totalorder %s29, %s32
      %p38 = scmp.eq.s32.totalorder %s19, 0
      %p39 = por %p37, %p38
      %p40 = scmp.ne.s32.totalorder %s29, %s32
      %p41 = scmp.eq.s32.totalorder %s24, 1
      %p42 = por %p40, %p41
      %p43 = scmp.ne.s32.totalorder %s32, %s33
      %p44 = scmp.eq.s32.totalorder %s24, 0
      %p45 = por %p43, %p44
      %p46 = scmp.ne.s32.totalorder %s32, %s33
      %p47 = scmp.eq.s32.totalorder %s25, 1
      %p48 = por %p46, %p47
      %p50 = scmp.ne.s32.totalorder %s33, %s49
      %p51 = scmp.eq.s32.totalorder %s25, 0
      %p52 = por %p50, %p51
      %s54 = sadd.s32 %s53, 1
      %p57 = scmp.eq.s32.totalorder %s19, 1
      %p58 = scmp.ne.s32.totalorder %s53, %s55
      %p59 = scmp.eq.s32.totalorder %s19, 0
      %p60 = por %p58, %p59
      %p61 = scmp.ne.s32.totalorder %s53, %s55
      %p62 = scmp.eq.s32.totalorder %s24, 1
      %p63 = por %p61, %p62
      %p64 = scmp.ne.s32.totalorder %s55, %s56
      %p65 = scmp.eq.s32.totalorder %s24, 0
      %p66 = por %p64, %p65
      %p67 = scmp.ne.s32.totalorder %s55, %s56
      %p68 = scmp.eq.s32.totalorder %s25, 1
      %p69 = por %p67, %p68
      %p71 = scmp.ne.s32.totalorder %s56, %s70
      %p72 = scmp.eq.s32.totalorder %s25, 0
      %p73 = por %p71, %p72
      %s75 = sadd.s32 %s74, 1
      %p78 = scmp.eq.s32.totalorder %s19, 1
      %p79 = scmp.ne.s32.totalorder %s74, %s76
      %p80 = scmp.eq.s32.totalorder %s19, 0
      %p81 = por %p79, %p80
      %p82 = scmp.ne.s32.totalorder %s74, %s76
      %p83 = scmp.eq.s32.totalorder %s24, 1
      %p84 = por %p82, %p83
      %p85 = scmp.ne.s32.totalorder %s76, %s77
      %p86 = scmp.eq.s32.totalorder %s24, 0
      %p87 = por %p85, %p86
      %p88 = scmp.ne.s32.totalorder %s76, %s77
      %p89 = scmp.eq.s32.totalorder %s25, 1
      %p90 = por %p88, %p89
      %p92 = scmp.ne.s32.totalorder %s77, %s91
      %p93 = scmp.eq.s32.totalorder %s25, 0
      %p94 = por %p92, %p93
      %s96 = sadd.s32 %s95, 1
      %p99 = scmp.eq.s32.totalorder %s19, 1
      %p100 = scmp.ne.s32.totalorder %s95, %s97
      %p101 = scmp.eq.s32.totalorder %s19, 0
      %p102 = por %p100, %p101
      %p103 = scmp.ne.s32.totalorder %s95, %s97
      %p104 = scmp.eq.s32.totalorder %s24, 1
      %p105 = por %p103, %p104
      %p106 = scmp.ne.s32.totalorder %s97, %s98
      %p107 = scmp.eq.s32.totalorder %s24, 0
      %p108 = por %p106, %p107
      %p109 = scmp.ne.s32.totalorder %s97, %s98
      %p110 = scmp.eq.s32.totalorder %s25, 1
      %p111 = por %p109, %p110
      %p113 = scmp.ne.s32.totalorder %s98, %s112
      %p114 = scmp.eq.s32.totalorder %s25, 0
      %p115 = por %p113, %p114
      %s117 = sadd.s32 %s116, 1
      %p120 = scmp.eq.s32.totalorder %s19, 1
      %p121 = scmp.ne.s32.totalorder %s116, %s118
      %p122 = scmp.eq.s32.totalorder %s19, 0
      %p123 = por %p121, %p122
      %p124 = scmp.ne.s32.totalorder %s116, %s118
      %p125 = scmp.eq.s32.totalorder %s24, 1
      %p126 = por %p124, %p125
      %p127 = scmp.ne.s32.totalorder %s118, %s119
      %p128 = scmp.eq.s32.totalorder %s24, 0
      %p129 = por %p127, %p128
      %p130 = scmp.ne.s32.totalorder %s118, %s119
      %p131 = scmp.eq.s32.totalorder %s25, 1
      %p132 = por %p130, %p131
      %p134 = scmp.ne.s32.totalorder %s119, %s133
      %p135 = scmp.eq.s32.totalorder %s25, 0
      %p136 = por %p134, %p135
      %s137 = ssub.s32 %s19, %s26
      %p138 = scmp.eq.s32.totalorder %s137, 0
      %s140 = sadd.s32 %s139, 1
      %s141 = scalar_select %p138, %s139, %s140
      %p144 = pneg %p138
      %p145 = scmp.eq.s32.totalorder %s19, 1
      %p146 = por %p144, %p145
      %p147 = scmp.ne.s32.totalorder %s139, %s142
      %p148 = scmp.eq.s32.totalorder %s19, 0
      %p149 = por %p147, %p148
      %p150 = scmp.ne.s32.totalorder %s139, %s142
      %p151 = scmp.eq.s32.totalorder %s24, 1
      %p152 = por %p150, %p151
      %p153 = scmp.ne.s32.totalorder %s142, %s143
      %p154 = scmp.eq.s32.totalorder %s24, 0
      %p155 = por %p153, %p154
      %p156 = scmp.ne.s32.totalorder %s142, %s143
      %p157 = scmp.eq.s32.totalorder %s25, 1
      %p158 = por %p156, %p157
      %p160 = scmp.ne.s32.totalorder %s143, %s159
      %p161 = scmp.eq.s32.totalorder %s25, 0
      %p162 = por %p160, %p161
      %s163 = ssub.s32 %s19, %s26
      %p164 = scmp.eq.s32.totalorder %s163, 0
      %s166 = sadd.s32 %s165, 1
      %s167 = scalar_select %p164, %s165, %s166
      %p170 = pneg %p164
      %p171 = scmp.eq.s32.totalorder %s19, 1
      %p172 = por %p170, %p171
      %p173 = scmp.ne.s32.totalorder %s165, %s168
      %p174 = scmp.eq.s32.totalorder %s19, 0
      %p175 = por %p173, %p174
      %p176 = scmp.ne.s32.totalorder %s165, %s168
      %p177 = scmp.eq.s32.totalorder %s24, 1
      %p178 = por %p176, %p177
      %p179 = scmp.ne.s32.totalorder %s168, %s169
      %p180 = scmp.eq.s32.totalorder %s24, 0
      %p181 = por %p179, %p180
      %p182 = scmp.ne.s32.totalorder %s168, %s169
      %p183 = scmp.eq.s32.totalorder %s25, 1
      %p184 = por %p182, %p183
      %p186 = scmp.ne.s32.totalorder %s169, %s185
      %p187 = scmp.eq.s32.totalorder %s25, 0
      %p188 = por %p186, %p187
      %p189 = scmp.le.s32.totalorder 1, %s19
      %p190 = scmp.lt.s32.totalorder %s19, 3
      %p191 = pnand %p189, %p190
      %p192 = pneg %p191
      // Predicated region
      $region9: #{tpu_custom_call.1} parent=5 // pred_check
        _
      $region10: #{tpu_custom_call.1} parent=5 // pred_check_branch
        %194 = sbr.rel (%p191) target = $region12
      $region11: #{tpu_custom_call.1} parent=5 // pred_region
        %s195 = ssub.s32 %s19, 1
        // Predicated region
        $region13: #{tpu_custom_call.1} parent=11 // pred_check
          %p196 = pneg %p66
        $region14: #{tpu_custom_call.1} parent=11 // pred_check_branch
          %198 = sbr.rel (%p196) target = $region16
        $region15: #{tpu_custom_call.1} parent=11 // pred_region
          _
        $region16: #{tpu_custom_call.1} parent=11 // pred_fallthru
          _
        // Predicated region
        $region17: #{tpu_custom_call.1} parent=11 // pred_check
          %p199 = pneg %p87
        $region18: #{tpu_custom_call.1} parent=11 // pred_check_branch
          %201 = sbr.rel (%p199) target = $region20
        $region19: #{tpu_custom_call.1} parent=11 // pred_region
          _
        $region20: #{tpu_custom_call.1} parent=11 // pred_fallthru
          _
        // Predicated region
        $region21: #{tpu_custom_call.1} parent=11 // pred_check
          %p202 = pneg %p108
        $region22: #{tpu_custom_call.1} parent=11 // pred_check_branch
          %204 = sbr.rel (%p202) target = $region24
        $region23: #{tpu_custom_call.1} parent=11 // pred_region
          _
        $region24: #{tpu_custom_call.1} parent=11 // pred_fallthru
          _
        // Predicated region
        $region25: #{tpu_custom_call.1} parent=11 // pred_check
          %p205 = pneg %p129
        $region26: #{tpu_custom_call.1} parent=11 // pred_check_branch
          %207 = sbr.rel (%p205) target = $region28
        $region27: #{tpu_custom_call.1} parent=11 // pred_region
          _
        $region28: #{tpu_custom_call.1} parent=11 // pred_fallthru
          _
      $region12: #{tpu_custom_call.1} parent=5 // pred_fallthru
        _
      %p208 = scmp.lt.s32.totalorder %s19, 2
      // Predicated region
      $region29: #{tpu_custom_call.1} parent=5 // pred_check
        %p209 = pneg %p208
      $region30: #{tpu_custom_call.1} parent=5 // pred_check_branch
        %211 = sbr.rel (%p209) target = $region32
      $region31: #{tpu_custom_call.1} parent=5 // pred_region
        // Predicated region
        $region33: #{tpu_custom_call.1} parent=31 // pred_check
          %p212 = pneg %p39
        $region34: #{tpu_custom_call.1} parent=31 // pred_check_branch
          %214 = sbr.rel (%p212) target = $region36
        $region35: #{tpu_custom_call.1} parent=31 // pred_region
          %p215 = scmp.lt.s32.totalorder %s19, 1
          %s216 = scalar_select %p215, %s19, 1
          %s217 = smul.addr %s216, 8
          %s218 = scalar_lea.vmem %s0, %s217
        $region36: #{tpu_custom_call.1} parent=31 // pred_fallthru
          _
      $region32: #{tpu_custom_call.1} parent=5 // pred_fallthru
        _
      %p219 = scmp.le.s32.totalorder 1, %s19
      %p220 = scmp.lt.s32.totalorder %s19, 3
      %p221 = pnand %p219, %p220
      %p222 = pneg %p221
      // Predicated region
      $region37: #{tpu_custom_call.1} parent=5 // pred_check
        _
      $region38: #{tpu_custom_call.1} parent=5 // pred_check_branch
        %224 = sbr.rel (%p221) target = $region40
      $region39: #{tpu_custom_call.1} parent=5 // pred_region
        %s225 = ssub.s32 %s19, 1
        %p226 = scmp.lt.s32.totalorder %s24, 1
        %s227 = scalar_select %p226, %s24, 1
        %s228 = smul.addr %s227, 8
        %s229 = scalar_lea.vmem %s0, %s228
        %p230 = pneg %p45
        %p231 = pneg %p42
        %p232 = pneg %p66
        %p233 = pneg %p63
        %p234 = pneg %p87
        %p235 = pneg %p84
        %p236 = pneg %p108
        %p237 = pneg %p105
        %p238 = pneg %p129
        %p239 = pneg %p126
        %p240 = pneg %p155
        %p241 = pneg %p152
        %s242 = sand.u32 %s142, 1
        %s243 = scalar_lea.sflag [#allocation5], %s242
        %s244 = sand.u32 %s142, 1
        %s245 = smul.addr %s244, 8
        %s246 = scalar_lea.vmem [#allocation4], %s245
        %p247 = pneg %p181
        %p248 = pneg %p178
        %s249 = sand.u32 %s168, 1
        %s250 = scalar_lea.sflag [#allocation7], %s249
        %s251 = sand.u32 %s168, 1
        %s252 = smul.addr %s251, 32
        %s253 = scalar_lea.vmem [#allocation6], %s252
        %p254 = scmp.lt.s32.totalorder %s24, 1
        %s255 = scalar_select %p254, %s24, 1
        %s256 = smul.addr %s255, 8
        %s257 = scalar_lea.vmem %s0, %s256
        %v259 = vld [vmem:[%s257] sm:$0xff]
        %vm260 = vcmask 261120
        %v261 = vsel %vm260, %v259, 0.0
        %262 = vadd.xlane.f32.xlu0 %v261
        %v263 = vpop.xlane.xlu0 %262
        %v264 = vrcp.pop 32.0
        %v265 = vmul.f32 32.0, %v264
        %v266 = vsub.f32 1.0, %v265
        %v267 = vmul.f32 %v264, %v266
        %v268 = vadd.f32 %v264, %v267
        %vm269 = vweird.f32 %v264
        %v270 = vsel %vm269, %v264, %v268
        %v271 = vmul.f32 %v263, %v270
        %v272 = vsub.f32 %v259, %v271
        %v273 = vmul.f32 %v272, %v272
        %v274 = vsel %vm260, %v273, 0.0
        %275 = vadd.xlane.f32.xlu0 %v274
        %v276 = vpop.xlane.xlu0 %275
        %v277 = vmul.f32 %v276, %v270
        %v278 = vadd.f32 %v277, 1e-05
        %v279 = vrsqrt.pop %v278
        %v280 = vmul.f32 %v279, %v278
        %v281 = vmul.f32 %v280, %v279
        %v282 = vmul.f32 0.5, %v281
        %v283 = vsub.f32 1.5, %v282
        %v284 = vmul.f32 %v279, %v283
        %vm285 = vweird.f32 %v278
        %vm286 = vweird.f32 %v279
        %vm287 = vmor %vm285, %vm286
        %v288 = vsel %vm287, %v279, %v284
        %v289 = vmul.f32 %v272, %v288
        %v290 = vld [vmem:[%s1] sm:$0x1]
        %v292 = vperm.slane %v290, 0
        %v294 = vmul.f32 %v289, %v292
        %v295 = vld [vmem:[%s2] sm:$0x1]
        %v297 = vperm.slane %v295, 0
        %v299 = vadd.f32 %v294, %v297
        %v300 = vpack.c.bf16 %v299, %v299
        %v301 = vld [vmem:[%s3] sm:$0xff]
        %v302 = vld [vmem:[%s3 + $0x8] sm:$0xff]
        %v303 = vld [vmem:[%s3 + $0x10] sm:$0xff]
        %v304 = vld [vmem:[%s3 + $0x18] sm:$0xff]
        %v309 = vunpack.c.l.b16 %v301
        %v310 = vunpack.c.h.b16 %v301
        %v311 = vunpack.c.l.b16 %v302
        %v312 = vunpack.c.h.b16 %v302
        %v313 = vunpack.c.l.b16 %v303
        %v314 = vunpack.c.h.b16 %v303
        %v315 = vunpack.c.l.b16 %v304
        %v316 = vunpack.c.h.b16 %v304
        %v317 = vpack.c.b16 %v311, %v309
        %v318 = vpack.c.b16 %v312, %v310
        %v319 = vpack.c.b16 %v315, %v313
        %v320 = vpack.c.b16 %v316, %v314
        %v326 = vsel %vm260, %v300, 0
        %328 = vmatpush.bf16.msra.mxu0 0
        %329 = vmatpush.bf16.msra.mxu0 0
        %330 = vmatpush.bf16.msra.mxu0 0
        %331 = vmatpush.bf16.msra.mxu0 0
        %332 = vmatpush.bf16.msra.mxu0 0
        %333 = vmatpush.bf16.msra.mxu0 0
        %334 = vmatpush.bf16.msra.mxu0 %v319
        %335 = vmatpush.bf16.msra.mxu0 %v317
        %336 = vmatmul.bf16.gmra.mxu0 %v326
        %v337 = vpop.f32.mrf.mxu0
        %v338 = vadd.f32 0.0, %v337
        %v339 = vpop.f32.mrf.mxu0
        %340 = vdwg.mxu0
        %341 = vmatpush.bf16.msra.mxu0 0
        %342 = vmatpush.bf16.msra.mxu0 0
        %343 = vmatpush.bf16.msra.mxu0 0
        %344 = vmatpush.bf16.msra.mxu0 0
        %345 = vmatpush.bf16.msra.mxu0 0
        %346 = vmatpush.bf16.msra.mxu0 0
        %347 = vmatpush.bf16.msra.mxu0 %v320
        %348 = vmatpush.bf16.msra.mxu0 %v318
        %349 = vmatmul.bf16.gmra.mxu0 %v326
        %v350 = vpop.f32.mrf.mxu0
        %v351 = vadd.f32 0.0, %v350
        %v352 = vpop.f32.mrf.mxu0
        %353 = vdwg.mxu0
        %v354 = vpack.c.bf16 %v351, %v338
        %vm355 = vcmask 1043456
        %vm356 = vcmask 523268
        %vm357 = vmor %vm356, %vm355
        %358 = vst.msk [vmem:[#allocation2] sm:$0xff] %vm357, %v354
        %v359 = vld [vmem:[#allocation2] sm:$0xf]
        %v360 = vld [vmem:[#allocation2 + $0x4] sm:$0xf]
        %v362 = vunpack.c.l.b16 %v359
        %v363 = vpack.c.b16 %v362, %v362
        %364 = vrot.lane.b32.xlu0 %v363, 64
        %v365 = vpop.permute.xlu0 %364
        %vm366 = vcmask 130048
        %v368 = vsel %vm366, %v359, 0
        %v371 = vsel %vm366, %v365, 0
        %373 = vmatpush.bf16.xpose.msra.mxu0 0
        %374 = vmatpush.bf16.xpose.msra.mxu0 0
        %375 = vmatpush.bf16.xpose.msra.mxu0 0
        %376 = vmatpush.bf16.xpose.msra.mxu0 0
        %377 = vmatpush.bf16.xpose.msra.mxu0 0
        %378 = vmatpush.bf16.xpose.msra.mxu0 0
        %379 = vmatpush.bf16.xpose.msra.mxu0 0
        %380 = vmatpush.bf16.xpose.msra.mxu0 %v371
        %381 = vmatmul.bf16.gmra.mxu0 %v368
        %v382 = vpop.f32.mrf.mxu0
        %v383 = vadd.f32 0.0, %v382
        %v384 = vpop.f32.mrf.mxu0
        %385 = vdwg.mxu0
        %vm386 = vcmask 64512
        %v387 = vsel %vm386, %v383, -inf
        %388 = vmax.xlane.f32.xlu0 %v387
        %v389 = vpop.xlane.xlu0 %388
        %v390 = vsub.f32 %v383, %v389
        %v391 = vmul.f32 %v390, 1.442695
        %v392 = vpow.pop %v391
        %v393 = vsel %vm386, %v392, 0.0
        %394 = vadd.xlane.f32.xlu0 %v393
        %v395 = vpop.xlane.xlu0 %394
        %v396 = vrcp.pop %v395
        %v397 = vmul.f32 %v392, %v396
        %398 = vst.msk [vmem:[%s253] sm:$0xff] %vm386, %v397
        %v399 = vpack.c.bf16 %v397, %v397
        %v401 = vsel %vm386, %v399, 0
        %v404 = vsel %vm355, %v360, 0
        %406 = vmatpush.bf16.msra.mxu0 0
        %407 = vmatpush.bf16.msra.mxu0 0
        %408 = vmatpush.bf16.msra.mxu0 0
        %409 = vmatpush.bf16.msra.mxu0 0
        %410 = vmatpush.bf16.msra.mxu0 0
        %411 = vmatpush.bf16.msra.mxu0 0
        %412 = vmatpush.bf16.msra.mxu0 0
        %413 = vmatpush.bf16.msra.mxu0 %v404
        %414 = vmatmul.bf16.gmra.mxu0 %v401
        %v415 = vpop.f32.mrf.mxu0
        %v416 = vadd.f32 0.0, %v415
        %v417 = vpop.f32.mrf.mxu0
        %418 = vdwg.mxu0
        %v419 = vpack.c.bf16 %v416, %v416
        %vm420 = vcmask 125952
        %421 = vst.msk [vmem:[#allocation3] sm:$0xf] %vm420, %v419
        %v422 = vld [vmem:[#allocation2] sm:$0xf]
        %v423 = vld [vmem:[#allocation2 + $0x4] sm:$0xf]
        %v425 = vunpack.c.l.b16 %v422
        %v426 = vpack.c.b16 %v425, %v425
        %427 = vrot.lane.b32.xlu0 %v426, 112
        %v428 = vpop.permute.xlu0 %427
        %429 = vrot.lane.b32.xlu0 %v426, 48
        %v430 = vpop.permute.xlu0 %429
        %v432 = vsel %vm366, %v428, 0
        %v435 = vsel %vm366, %v430, 0
        %437 = vmatpush.bf16.xpose.msra.mxu0 0
        %438 = vmatpush.bf16.xpose.msra.mxu0 0
        %439 = vmatpush.bf16.xpose.msra.mxu0 0
        %440 = vmatpush.bf16.xpose.msra.mxu0 0
        %441 = vmatpush.bf16.xpose.msra.mxu0 0
        %442 = vmatpush.bf16.xpose.msra.mxu0 0
        %443 = vmatpush.bf16.xpose.msra.mxu0 0
        %444 = vmatpush.bf16.xpose.msra.mxu0 %v435
        %445 = vmatmul.bf16.gmra.mxu0 %v432
        %v446 = vpop.f32.mrf.mxu0
        %v447 = vadd.f32 0.0, %v446
        %v448 = vpop.f32.mrf.mxu0
        %449 = vdwg.mxu0
        %v450 = vsel %vm386, %v447, -inf
        %451 = vmax.xlane.f32.xlu0 %v450
        %v452 = vpop.xlane.xlu0 %451
        %v453 = vsub.f32 %v447, %v452
        %v454 = vmul.f32 %v453, 1.442695
        %v455 = vpow.pop %v454
        %v456 = vsel %vm386, %v455, 0.0
        %457 = vadd.xlane.f32.xlu0 %v456
        %v458 = vpop.xlane.xlu0 %457
        %v459 = vrcp.pop %v458
        %v460 = vmul.f32 %v455, %v459
        %s461 = scalar_lea.vmem %s253, 8 [#allocation6]
        %462 = vst.msk [vmem:[%s461] sm:$0xff] %vm386, %v460
        %v463 = vpack.c.bf16 %v460, %v460
        %v465 = vunpack.c.l.b16 %v423
        %v466 = vpack.c.b16 %v465, %v465
        %467 = vrot.lane.b32.xlu0 %v466, 112
        %v468 = vpop.permute.xlu0 %467
        %v470 = vsel %vm386, %v463, 0
        %v473 = vsel %vm355, %v468, 0
        %475 = vmatpush.bf16.msra.mxu0 0
        %476 = vmatpush.bf16.msra.mxu0 0
        %477 = vmatpush.bf16.msra.mxu0 0
        %478 = vmatpush.bf16.msra.mxu0 0
        %479 = vmatpush.bf16.msra.mxu0 0
        %480 = vmatpush.bf16.msra.mxu0 0
        %481 = vmatpush.bf16.msra.mxu0 0
        %482 = vmatpush.bf16.msra.mxu0 %v473
        %483 = vmatmul.bf16.gmra.mxu0 %v470
        %v484 = vpop.f32.mrf.mxu0
        %v485 = vadd.f32 0.0, %v484
        %v486 = vpop.f32.mrf.mxu0
        %487 = vdwg.mxu0
        %v488 = vpack.c.bf16 %v485, %v485
        %490 = vrot.lane.b32.xlu0 %v488, 16
        %v491 = vpop.permute.xlu0 %490
        %vm493 = vcmask 257152
        %494 = vst.msk [vmem:[#allocation3] sm:$0xf] %vm493, %v491
        %v495 = vld [vmem:[#allocation2] sm:$0xf]
        %v496 = vld [vmem:[#allocation2 + $0x4] sm:$0xf]
        %v498 = vunpack.c.l.b16 %v495
        %v499 = vpack.c.b16 %v498, %v498
        %500 = vrot.lane.b32.xlu0 %v499, 96
        %v501 = vpop.permute.xlu0 %500
        %502 = vrot.lane.b32.xlu0 %v499, 32
        %v503 = vpop.permute.xlu0 %502
        %v505 = vsel %vm366, %v501, 0
        %v508 = vsel %vm366, %v503, 0
        %510 = vmatpush.bf16.xpose.msra.mxu0 0
        %511 = vmatpush.bf16.xpose.msra.mxu0 0
        %512 = vmatpush.bf16.xpose.msra.mxu0 0
        %513 = vmatpush.bf16.xpose.msra.mxu0 0
        %514 = vmatpush.bf16.xpose.msra.mxu0 0
        %515 = vmatpush.bf16.xpose.msra.mxu0 0
        %516 = vmatpush.bf16.xpose.msra.mxu0 0
        %517 = vmatpush.bf16.xpose.msra.mxu0 %v508
        %518 = vmatmul.bf16.gmra.mxu0 %v505
        %v519 = vpop.f32.mrf.mxu0
        %v520 = vadd.f32 0.0, %v519
        %v521 = vpop.f32.mrf.mxu0
        %522 = vdwg.mxu0
        %v523 = vsel %vm386, %v520, -inf
        %524 = vmax.xlane.f32.xlu0 %v523
        %v525 = vpop.xlane.xlu0 %524
        %v526 = vsub.f32 %v520, %v525
        %v527 = vmul.f32 %v526, 1.442695
        %v528 = vpow.pop %v527
        %v529 = vsel %vm386, %v528, 0.0
        %530 = vadd.xlane.f32.xlu0 %v529
        %v531 = vpop.xlane.xlu0 %530
        %v532 = vrcp.pop %v531
        %v533 = vmul.f32 %v528, %v532
        %s534 = scalar_lea.vmem %s253, 16 [#allocation6]
        %535 = vst.msk [vmem:[%s534] sm:$0xff] %vm386, %v533
        %v536 = vpack.c.bf16 %v533, %v533
        %v538 = vunpack.c.l.b16 %v496
        %v539 = vpack.c.b16 %v538, %v538
        %540 = vrot.lane.b32.xlu0 %v539, 96
        %v541 = vpop.permute.xlu0 %540
        %v543 = vsel %vm386, %v536, 0
        %v546 = vsel %vm355, %v541, 0
        %548 = vmatpush.bf16.msra.mxu0 0
        %549 = vmatpush.bf16.msra.mxu0 0
        %550 = vmatpush.bf16.msra.mxu0 0
        %551 = vmatpush.bf16.msra.mxu0 0
        %552 = vmatpush.bf16.msra.mxu0 0
        %553 = vmatpush.bf16.msra.mxu0 0
        %554 = vmatpush.bf16.msra.mxu0 0
        %555 = vmatpush.bf16.msra.mxu0 %v546
        %556 = vmatmul.bf16.gmra.mxu0 %v543
        %v557 = vpop.f32.mrf.mxu0
        %v558 = vadd.f32 0.0, %v557
        %v559 = vpop.f32.mrf.mxu0
        %560 = vdwg.mxu0
        %v561 = vpack.c.bf16 %v558, %v558
        %563 = vrot.lane.b32.xlu0 %v561, 32
        %v564 = vpop.permute.xlu0 %563
        %vm566 = vcmask 388352
        %567 = vst.msk [vmem:[#allocation3] sm:$0xf] %vm566, %v564
        %v568 = vld [vmem:[#allocation2] sm:$0xf]
        %v569 = vld [vmem:[#allocation2 + $0x4] sm:$0xf]
        %v571 = vunpack.c.l.b16 %v568
        %v572 = vpack.c.b16 %v571, %v571
        %573 = vrot.lane.b32.xlu0 %v572, 80
        %v574 = vpop.permute.xlu0 %573
        %575 = vrot.lane.b32.xlu0 %v572, 16
        %v576 = vpop.permute.xlu0 %575
        %v578 = vsel %vm366, %v574, 0
        %v581 = vsel %vm366, %v576, 0
        %583 = vmatpush.bf16.xpose.msra.mxu0 0
        %584 = vmatpush.bf16.xpose.msra.mxu0 0
        %585 = vmatpush.bf16.xpose.msra.mxu0 0
        %586 = vmatpush.bf16.xpose.msra.mxu0 0
        %587 = vmatpush.bf16.xpose.msra.mxu0 0
        %588 = vmatpush.bf16.xpose.msra.mxu0 0
        %589 = vmatpush.bf16.xpose.msra.mxu0 0
        %590 = vmatpush.bf16.xpose.msra.mxu0 %v581
        %591 = vmatmul.bf16.gmra.mxu0 %v578
        %v592 = vpop.f32.mrf.mxu0
        %v593 = vadd.f32 0.0, %v592
        %v594 = vpop.f32.mrf.mxu0
        %595 = vdwg.mxu0
        %v596 = vsel %vm386, %v593, -inf
        %597 = vmax.xlane.f32.xlu0 %v596
        %v598 = vpop.xlane.xlu0 %597
        %v599 = vsub.f32 %v593, %v598
        %v600 = vmul.f32 %v599, 1.442695
        %v601 = vpow.pop %v600
        %v602 = vsel %vm386, %v601, 0.0
        %603 = vadd.xlane.f32.xlu0 %v602
        %v604 = vpop.xlane.xlu0 %603
        %v605 = vrcp.pop %v604
        %v606 = vmul.f32 %v601, %v605
        %s607 = scalar_lea.vmem %s253, 24 [#allocation6]
        %608 = vst.msk [vmem:[%s607] sm:$0xff] %vm386, %v606
        %v609 = vpack.c.bf16 %v606, %v606
        %v611 = vunpack.c.l.b16 %v569
        %v612 = vpack.c.b16 %v611, %v611
        %613 = vrot.lane.b32.xlu0 %v612, 80
        %v614 = vpop.permute.xlu0 %613
        %v616 = vsel %vm386, %v609, 0
        %v619 = vsel %vm355, %v614, 0
        %621 = vmatpush.bf16.msra.mxu0 0
        %622 = vmatpush.bf16.msra.mxu0 0
        %623 = vmatpush.bf16.msra.mxu0 0
        %624 = vmatpush.bf16.msra.mxu0 0
        %625 = vmatpush.bf16.msra.mxu0 0
        %626 = vmatpush.bf16.msra.mxu0 0
        %627 = vmatpush.bf16.msra.mxu0 0
        %628 = vmatpush.bf16.msra.mxu0 %v619
        %629 = vmatmul.bf16.gmra.mxu0 %v616
        %v630 = vpop.f32.mrf.mxu0
        %v631 = vadd.f32 0.0, %v630
        %v632 = vpop.f32.mrf.mxu0
        %633 = vdwg.mxu0
        %v634 = vpack.c.bf16 %v631, %v631
        %636 = vrot.lane.b32.xlu0 %v634, 48
        %v637 = vpop.permute.xlu0 %636
        %vm639 = vcmask 519552
        %640 = vst.msk [vmem:[#allocation3] sm:$0xf] %vm639, %v637
        %v641 = vld [vmem:[#allocation3] sm:$0xf]
        %v642 = vld [vmem:[%s4] sm:$0xf]
        %v643 = vld [vmem:[%s4 + $0x4] sm:$0xf]
        %v644 = vld [vmem:[%s4 + $0x8] sm:$0xf]
        %v645 = vld [vmem:[%s4 + $0xc] sm:$0xf]
        %v646 = vld [vmem:[%s4 + $0x10] sm:$0xf]
        %v647 = vld [vmem:[%s4 + $0x14] sm:$0xf]
        %v648 = vld [vmem:[%s4 + $0x18] sm:$0xf]
        %v649 = vld [vmem:[%s4 + $0x1c] sm:$0xf]
        %v658 = vunpack.c.l.b16 %v642
        %v659 = vunpack.c.l.b16 %v643
        %v660 = vunpack.c.l.b16 %v644
        %v661 = vunpack.c.l.b16 %v645
        %v662 = vunpack.c.l.b16 %v646
        %v663 = vunpack.c.l.b16 %v647
        %v664 = vunpack.c.l.b16 %v648
        %v665 = vunpack.c.l.b16 %v649
        %v666 = vpack.c.b16 %v659, %v658
        %v667 = vpack.c.b16 %v661, %v660
        %v668 = vpack.c.b16 %v663, %v662
        %v669 = vpack.c.b16 %v665, %v664
        %vm674 = vcmask 523264
        %v676 = vsel %vm674, %v641, 0
        %678 = vmatpush.bf16.msra.mxu0 0
        %679 = vmatpush.bf16.msra.mxu0 0
        %680 = vmatpush.bf16.msra.mxu0 0
        %681 = vmatpush.bf16.msra.mxu0 0
        %682 = vmatpush.bf16.msra.mxu0 %v669
        %683 = vmatpush.bf16.msra.mxu0 %v668
        %684 = vmatpush.bf16.msra.mxu0 %v667
        %685 = vmatpush.bf16.msra.mxu0 %v666
        %686 = vmatmul.bf16.gmra.mxu0 %v676
        %v687 = vpop.f32.mrf.mxu0
        %v688 = vadd.f32 0.0, %v687
        %v689 = vpop.f32.mrf.mxu0
        %690 = vdwg.mxu0
        %691 = vst.msk [vmem:[%s246] sm:$0xff] %vm260, %v688
        %s692 = sand.u32 %s142, 1
        %s693 = scalar_lea.sflag [#allocation5], %s692
        %s694 = sand.u32 %s142, 1
        %s695 = smul.addr %s694, 8
        %s696 = scalar_lea.vmem [#allocation4], %s695
        %s697 = sand.u32 %s168, 1
        %s698 = scalar_lea.sflag [#allocation7], %s697
        %s699 = sand.u32 %s168, 1
        %s700 = smul.addr %s699, 32
        %s701 = scalar_lea.vmem [#allocation6], %s700
        // Predicated region
        $region41: #{tpu_custom_call.1} parent=39 // pred_check
          %p702 = pneg %p152
        $region42: #{tpu_custom_call.1} parent=39 // pred_check_branch
          %704 = sbr.rel (%p702) target = $region44
        $region43: #{tpu_custom_call.1} parent=39 // pred_region
          %706 = vsyncadd %s693, 0
          %s707 = smul.addr %s24, 8
          %s708 = scalar_lea.hbm %s5, %s707
          %s710 = sshll.u32 %s696, 4
          %s711 = int_to_ptr.vmem [resolvable:$true] %s710
          %s712 = sshll.u32 %s708, 4
          %s713 = int_to_ptr.hbm [resolvable:$true] %s712
          %715 = dma.vmem_to_hbm [thread:$0]  %s711, 128, %s713, %s693
        $region44: #{tpu_custom_call.1} parent=39 // pred_fallthru
          _
        // Predicated region
        $region45: #{tpu_custom_call.1} parent=39 // pred_check
          %p716 = pneg %p178
        $region46: #{tpu_custom_call.1} parent=39 // pred_check_branch
          %718 = sbr.rel (%p716) target = $region48
        $region47: #{tpu_custom_call.1} parent=39 // pred_region
          %720 = vsyncadd %s698, 0
          %s721 = smul.addr %s24, 4
          %s722 = smul.addr %s721, 8
          %s723 = scalar_lea.hbm %s6, %s722
          %s724 = sshll.u32 %s701, 4
          %s725 = int_to_ptr.vmem [resolvable:$true] %s724
          %s726 = sshll.u32 %s723, 4
          %s727 = int_to_ptr.hbm [resolvable:$true] %s726
          %732 = dma.vmem_to_hbm [thread:$0]  %s725, 512, %s727, %s698, 128, 128, 8
        $region48: #{tpu_custom_call.1} parent=39 // pred_fallthru
          _
      $region40: #{tpu_custom_call.1} parent=5 // pred_fallthru
        _
      %p733 = scmp.le.s32.totalorder 2, %s19
      // Predicated region
      $region49: #{tpu_custom_call.1} parent=5 // pred_check
        %p734 = pneg %p733
      $region50: #{tpu_custom_call.1} parent=5 // pred_check_branch
        %736 = sbr.rel (%p734) target = $region52
      $region51: #{tpu_custom_call.1} parent=5 // pred_region
        %s737 = ssub.s32 %s19, 2
        // Predicated region
        $region53: #{tpu_custom_call.1} parent=51 // pred_check
          %p738 = pneg %p158
        $region54: #{tpu_custom_call.1} parent=51 // pred_check_branch
          %740 = sbr.rel (%p738) target = $region56
        $region55: #{tpu_custom_call.1} parent=51 // pred_region
          %s741 = sand.u32 %s143, 1
          %s742 = scalar_lea.sflag [#allocation5], %s741
          %s743 = sand.u32 %s143, 1
          %s744 = smul.addr %s743, 8
          %s745 = scalar_lea.vmem [#allocation4], %s744
          %747 = dma.done %s742, 128
        $region56: #{tpu_custom_call.1} parent=51 // pred_fallthru
          _
        // Predicated region
        $region57: #{tpu_custom_call.1} parent=51 // pred_check
          %p748 = pneg %p184
        $region58: #{tpu_custom_call.1} parent=51 // pred_check_branch
          %750 = sbr.rel (%p748) target = $region60
        $region59: #{tpu_custom_call.1} parent=51 // pred_region
          %s751 = sand.u32 %s169, 1
          %s752 = scalar_lea.sflag [#allocation7], %s751
          %s753 = sand.u32 %s169, 1
          %s754 = smul.addr %s753, 32
          %s755 = scalar_lea.vmem [#allocation6], %s754
          %757 = dma.done %s752, 512
        $region60: #{tpu_custom_call.1} parent=51 // pred_fallthru
          _
      $region52: #{tpu_custom_call.1} parent=5 // pred_fallthru
        _
    $region6: #{tpu_custom_call.1} parent=1 // loop_footer
      %s23 = sadd.s32 1, %s19
    $region7: #{tpu_custom_call.1} parent=1 // loop_footer_branch
      %18 = sbr.rel target = $region3
    $region8: #{tpu_custom_call.1} parent=1 // loop_exit
      _
    %758 = vsyncpa [#allocation5], 1
    %s759 = scalar_lea.sflag [#allocation5], 1
    %760 = vsyncpa %s759, 1
    %761 = vsyncpa [#allocation7], 1
    %s762 = scalar_lea.sflag [#allocation7], 1
    %763 = vsyncpa %s762, 1

</llo_original>
